<compile_context>
chip_gen: v5e
topology: v5e:2x2
jax: 0.10.0
libtpu: 0.0.40
codegen_flags: <defaults>
</compile_context>

<pallas_src>
import functools

import jax
import jax.numpy as jnp
from jax import lax
from jax.experimental import pallas as pl
from jax.experimental.pallas import tpu as pltpu

ALPHA = 1.1
BETA = 1.8


def _round_up(x, m):
    return ((x + m - 1) // m) * m


def _silu_mul(z, mul, out_dtype):
    # sigmoid via EUP exp + EUP approx reciprocal (frees VALU slots in the
    # epilogue); z and mul are f32.
    sig = pl.reciprocal(1.0 + jnp.exp(-z), approx=True)
    return (z * sig * mul).astype(out_dtype)


def _kernel_2d(a_ref, b_ref, bias_ref, mul_ref, o_ref, *, alpha, beta):
    # Full-K dot in one shot: no accumulator scratch, no phase gating.
    acc = jnp.dot(a_ref[...], b_ref[...], preferred_element_type=jnp.float32)
    z = beta * bias_ref[...] + alpha * acc
    o_ref[...] = _silu_mul(z, mul_ref[...], o_ref.dtype)


def _kernel_3d(a_ref, b_ref, bias_ref, mul_ref, o_ref, acc_ref, *,
               alpha, beta, k_total, tk, mask_k):
    k = pl.program_id(2)

    @pl.when(k == 0)
    def _():
        acc_ref[...] = jnp.zeros_like(acc_ref)

    a = a_ref[...]
    b = b_ref[...]
    if mask_k:
        # Zero the K tail of BOTH operands (last k block only is affected;
        # for earlier blocks `valid >= tk` and the where is a no-op).  Zeroing
        # both sides guarantees 0*0 contributions even if the out-of-bounds
        # VMEM contents are NaN/Inf.
        valid = k_total - k * tk
        a_col = lax.broadcasted_iota(jnp.int32, a.shape, 1)
        b_row = lax.broadcasted_iota(jnp.int32, b.shape, 0)
        a = jnp.where(a_col < valid, a, jnp.zeros_like(a))
        b = jnp.where(b_row < valid, b, jnp.zeros_like(b))

    acc_ref[...] += jnp.dot(a, b, preferred_element_type=jnp.float32)

    @pl.when(k == pl.num_programs(2) - 1)
    def _():
        # addmm with alpha/beta; bias tile is (1, tn) and broadcasts over rows.
        z = beta * bias_ref[...] + alpha * acc_ref[...]
        o_ref[...] = _silu_mul(z, mul_ref[...], o_ref.dtype)


def addmm_1dbias_silu_mul(mat1, mat2, bias, mul_tensor, *,
                          alpha=ALPHA, beta=BETA,
                          tm=512, tn=1024, tk=1024,
                          cast_to_bf16=True):
    M, K = mat1.shape
    K2, N = mat2.shape
    assert K == K2
    assert bias.shape == (N,)
    assert mul_tensor.shape == (M, N)
    out_dtype = mat1.dtype

    if cast_to_bf16:
        # bf16 operands, f32 accumulation (preferred_element_type below).
        mat1 = mat1.astype(jnp.bfloat16)
        mat2 = mat2.astype(jnp.bfloat16)
    in_bytes = 2 if cast_to_bf16 else 4

    # ---- M/N tile selection --------------------------------------------
    # Small dims use the full extent (always a legal block regardless of
    # (8,128)/(16,128) divisibility); large dims use hardware-aligned tiles
    # and the tail block is handled by Pallas partial-block clipping.
    if M <= tm:
        tm = M
    if N <= tn:
        tn = N

    # v7x megacore: make sure the 'parallel' axes have at least 2 blocks so
    # both TensorCores get work (harmless extra grid step on v5e/v6e).
    if pl.cdiv(M, tm) * pl.cdiv(N, tn) < 2:
        if N >= 256:
            tn = max(128, _round_up(pl.cdiv(N, 2), 128))
        elif M >= 32:
            tm = max(16, _round_up(pl.cdiv(M, 2), 16))
    grid_m = pl.cdiv(M, tm)
    grid_n = pl.cdiv(N, tn)

    # ---- K tile selection ------------------------------------------------
    if K <= tk:
        num_k = 1
        tk = K            # full K, single-shot dot, no accumulator scratch
        mask_k = False
    else:
        num_k = pl.cdiv(K, tk)
        tk = _round_up(pl.cdiv(K, num_k), 128)   # balance the K chunks
        num_k = pl.cdiv(K, tk)
        mask_k = (K % tk) != 0                   # zero-mask the K tail in-kernel

    bias2d = bias.reshape(1, N)  # 2-D for TPU-friendly layout

    # ---- VMEM budget: double-buffered tiles + resident f32 accumulator ----
    tm_r = _round_up(tm, 16)
    tn_r = _round_up(tn, 128)
    tk_lane = _round_up(tk, 128)
    tk_sub = _round_up(tk, 16)
    a_bytes = tm_r * tk_lane * in_bytes
    b_bytes = tk_sub * tn_r * in_bytes
    bias_bytes = 8 * tn_r * 4
    mul_bytes = tm_r * tn_r * 4
    out_bytes = tm_r * tn_r * 4
    acc_bytes = tm_r * tn_r * 4 if num_k > 1 else 0
    vmem_needed = 2 * (a_bytes + b_bytes + bias_bytes + mul_bytes + out_bytes) + acc_bytes
    # +25% / +4 MiB headroom for Mosaic internal scratch; cap below the 64 MiB
    # physical VMEM of v7x.
    vmem_limit = int(min(max(vmem_needed * 5 // 4 + (4 << 20), 16 << 20), 48 << 20))

    if num_k == 1:
        kernel = functools.partial(_kernel_2d, alpha=alpha, beta=beta)
        grid = (grid_m, grid_n)
        in_specs = [
            pl.BlockSpec((tm, K), lambda i, j: (i, 0)),    # mat1 (full K)
            pl.BlockSpec((K, tn), lambda i, j: (0, j)),    # mat2 (full K)
            pl.BlockSpec((1, tn), lambda i, j: (0, j)),    # bias
            pl.BlockSpec((tm, tn), lambda i, j: (i, j)),   # mul_tensor
        ]
        out_specs = pl.BlockSpec((tm, tn), lambda i, j: (i, j))
        scratch_shapes = []
        dims = ("parallel", "parallel")
    else:
        kernel = functools.partial(_kernel_3d, alpha=alpha, beta=beta,
                                   k_total=K, tk=tk, mask_k=mask_k)
        grid = (grid_m, grid_n, num_k)
        in_specs = [
            pl.BlockSpec((tm, tk), lambda i, j, k: (i, k)),    # mat1
            pl.BlockSpec((tk, tn), lambda i, j, k: (k, j)),    # mat2
            pl.BlockSpec((1, tn), lambda i, j, k: (0, j)),     # bias
            pl.BlockSpec((tm, tn), lambda i, j, k: (i, j)),    # mul_tensor
        ]
        out_specs = pl.BlockSpec((tm, tn), lambda i, j, k: (i, j))
        scratch_shapes = [pltpu.VMEM((tm, tn), jnp.float32)]
        dims = ("parallel", "parallel", "arbitrary")

    out = pl.pallas_call(
        kernel,
        out_shape=jax.ShapeDtypeStruct((M, N), out_dtype),
        grid_spec=pltpu.PrefetchScalarGridSpec(
            num_scalar_prefetch=0,
            grid=grid,
            in_specs=in_specs,
            out_specs=out_specs,
            scratch_shapes=scratch_shapes),
        compiler_params=pltpu.CompilerParams(
            dimension_semantics=dims,
            vmem_limit_bytes=vmem_limit),
    )(mat1, mat2, bias2d, mul_tensor)
    return out


def _reference(mat1, mat2, bias, mul_tensor, alpha=ALPHA, beta=BETA,
               cast_to_bf16=True):
    # Reference matching the kernel's numerics: bf16-rounded operands with
    # f32 accumulation, exact sigmoid.
    if cast_to_bf16:
        mat1 = mat1.astype(jnp.bfloat16)
        mat2 = mat2.astype(jnp.bfloat16)
    z = beta * bias[None, :] + alpha * jnp.dot(
        mat1, mat2, preferred_element_type=jnp.float32)
    return (z * jax.nn.sigmoid(z)) * mul_tensor


if __name__ == "__main__":
    key = jax.random.PRNGKey(0)

    # --- Small test shape consistent with torch.addmm(bias, mat1, mat2) ---
    # (2-D fast path: single K block, no accumulator scratch.)
    M, K, N = 8, 32, 128
    k1, k2, k3, k4, k5 = jax.random.split(key, 5)
    mat1 = jax.random.normal(k1, (M, K), dtype=jnp.float32)
    mat2 = jax.random.normal(k2, (K, N), dtype=jnp.float32)
    bias = jax.random.normal(k3, (N,), dtype=jnp.float32)
    mul_tensor = jax.random.normal(k4, (M, N), dtype=jnp.float32)

    out = jax.block_until_ready(addmm_1dbias_silu_mul(mat1, mat2, bias, mul_tensor))
    ref = _reference(mat1, mat2, bias, mul_tensor)
    assert out.shape == (M, N) and out.dtype == jnp.float32
    # Tolerance covers the approx-EUP reciprocal and accumulation-order
    # differences (operand rounding is identical to the reference).
    assert jnp.allclose(out, ref, atol=1e-2, rtol=1e-2), "mismatch vs reference (small)"

    # --- Non-divisible shape: 3-D accumulator path, in-kernel K-tail mask,
    # --- M/N tail handled by block clipping, megacore tile split (no jnp.pad).
    M2, K2_, N2 = 136, 1100, 384
    ka, kb, kc, kd = jax.random.split(k5, 4)
    a2 = jax.random.normal(ka, (M2, K2_), dtype=jnp.float32)
    b2 = jax.random.normal(kb, (K2_, N2), dtype=jnp.float32)
    c2 = jax.random.normal(kc, (N2,), dtype=jnp.float32)
    m2 = jax.random.normal(kd, (M2, N2), dtype=jnp.float32)

    out2 = jax.block_until_ready(addmm_1dbias_silu_mul(a2, b2, c2, m2))
    ref2 = _reference(a2, b2, c2, m2)
    assert jnp.allclose(out2, ref2, atol=1e-2, rtol=1e-2), "mismatch vs reference (tiled)"

    print("KERNEL_OK")
</pallas_src>

<mosaic_0001>
module attributes {stable_mosaic.version = 11 : i64} {
  func.func @_kernel_2d(%arg0: i32, %arg1: i32, %arg2: memref<8x32xbf16, #tpu.memory_space<vmem>>, %arg3: memref<32x128xbf16, #tpu.memory_space<vmem>>, %arg4: memref<1x128xf32, #tpu.memory_space<vmem>>, %arg5: memref<8x128xf32, #tpu.memory_space<vmem>>, %arg6: memref<8x128xf32, #tpu.memory_space<vmem>>) attributes {dimension_semantics = [#tpu.dimension_semantics<parallel>, #tpu.dimension_semantics<parallel>], iteration_bounds = array<i64: 1, 1>, scalar_prefetch = 0 : i64, scratch_operands = 0 : i64, tpu.core_type = #tpu.core_type<tc>, window_params = [{transform_indices = @transform_0, window_bounds = array<i64: 8, 32>}, {transform_indices = @transform_1, window_bounds = array<i64: 32, 128>}, {transform_indices = @transform_2, window_bounds = array<i64: 1, 128>}, {transform_indices = @transform_3, window_bounds = array<i64: 8, 128>}, {transform_indices = @transform_4, window_bounds = array<i64: 8, 128>}]} {
    %c0 = arith.constant 0 : index
    %c0_0 = arith.constant 0 : index
    %0 = vector.load %arg2[%c0, %c0_0] : memref<8x32xbf16, #tpu.memory_space<vmem>>, vector<8x32xbf16>
    %c0_1 = arith.constant 0 : index
    %c0_2 = arith.constant 0 : index
    %1 = vector.load %arg3[%c0_1, %c0_2] : memref<32x128xbf16, #tpu.memory_space<vmem>>, vector<32x128xbf16>
    %cst = arith.constant dense<0.000000e+00> : vector<8x128xf32>
    %2 = tpu.matmul %0, %1, %cst {dimension_numbers = #tpu.dot_dimension_numbers<[1], [0], [0], [1], [0, 0, 1, 1], [], []>} : vector<8x32xbf16>, vector<32x128xbf16>, vector<8x128xf32> -> vector<8x128xf32>
    %c0_3 = arith.constant 0 : index
    %c0_4 = arith.constant 0 : index
    %3 = vector.load %arg4[%c0_3, %c0_4] : memref<1x128xf32, #tpu.memory_space<vmem>>, vector<1x128xf32>
    %cst_5 = arith.constant 1.800000e+00 : f32
    %4 = vector.broadcast %cst_5 : f32 to vector<1x128xf32>
    %5 = arith.mulf %4, %3 : vector<1x128xf32>
    %cst_6 = arith.constant 1.100000e+00 : f32
    %6 = vector.broadcast %cst_6 : f32 to vector<8x128xf32>
    %7 = arith.mulf %6, %2 : vector<8x128xf32>
    %8 = vector.broadcast %5 : vector<1x128xf32> to vector<8x128xf32>
    %9 = arith.addf %8, %7 : vector<8x128xf32>
    %c0_7 = arith.constant 0 : index
    %c0_8 = arith.constant 0 : index
    %10 = vector.load %arg5[%c0_7, %c0_8] : memref<8x128xf32, #tpu.memory_space<vmem>>, vector<8x128xf32>
    %cst_9 = arith.constant 0.000000e+00 : f32
    %11 = vector.broadcast %cst_9 : f32 to vector<8x128xf32>
    %12 = arith.subf %11, %9 : vector<8x128xf32>
    %13 = math.exp %12 : vector<8x128xf32>
    %cst_10 = arith.constant 1.000000e+00 : f32
    %14 = vector.broadcast %cst_10 : f32 to vector<8x128xf32>
    %15 = arith.addf %14, %13 : vector<8x128xf32>
    %16 = tpu.reciprocal %15 {approx = true} : vector<8x128xf32> -> vector<8x128xf32>
    %17 = arith.mulf %9, %16 : vector<8x128xf32>
    %18 = arith.mulf %17, %10 : vector<8x128xf32>
    %c0_11 = arith.constant 0 : index
    %c0_12 = arith.constant 0 : index
    %19 = vector.load %arg6[%c0_11, %c0_12] : memref<8x128xf32, #tpu.memory_space<vmem>>, vector<8x128xf32>
    tpu.vector_store %arg6[%c0_11, %c0_12], %18 {strides = array<i32>} : memref<8x128xf32, #tpu.memory_space<vmem>>, vector<8x128xf32>,
    return
  }
  func.func @transform_0(%arg0: i32, %arg1: i32) -> (i32, i32) {
    %c0_i32 = arith.constant 0 : i32
    %c0_i32_0 = arith.constant 0 : i32
    return %arg0, %c0_i32 : i32, i32
  }
  func.func @transform_1(%arg0: i32, %arg1: i32) -> (i32, i32) {
    %c0_i32 = arith.constant 0 : i32
    %c0_i32_0 = arith.constant 0 : i32
    return %c0_i32, %arg1 : i32, i32
  }
  func.func @transform_2(%arg0: i32, %arg1: i32) -> (i32, i32) {
    %c0_i32 = arith.constant 0 : i32
    %c0_i32_0 = arith.constant 0 : i32
    return %c0_i32, %arg1 : i32, i32
  }
  func.func @transform_3(%arg0: i32, %arg1: i32) -> (i32, i32) {
    %c0_i32 = arith.constant 0 : i32
    return %arg0, %arg1 : i32, i32
  }
  func.func @transform_4(%arg0: i32, %arg1: i32) -> (i32, i32) {
    %c0_i32 = arith.constant 0 : i32
    return %arg0, %arg1 : i32, i32
  }
}

</mosaic_0001>

<llo_original>
// kernel: tpu_custom_call.1
$region0: #{tpu_custom_call.1}
  #allocation0 [shape = 'u32[]', space=smem, size = 0x4, offset = 0x4, fixed_abs, tag = 'smem constant byte address 0x4 - core index']
  #allocation1 [shape = 'u32[72,128]{1,0:T(1,128)}', space=vmem, size = 0x9000, scoped, tag = 'internal scratch']
  %s0 = inlined_call_operand.hbm [shape: bf16[8,32], index: 0, kind: input, shape index: {}]
  %s1 = inlined_call_operand.hbm [shape: bf16[32,128], index: 1, kind: input, shape index: {}]
  %s2 = inlined_call_operand.vmem [shape: f32[1,128], index: 2, kind: input, shape index: {}]
  %s3 = inlined_call_operand.hbm [shape: f32[8,128], index: 3, kind: input, shape index: {}]
  %s4 = inlined_call_operand.hbm [shape: f32[8,128], index: 4, kind: output, shape index: {}]
  %s5 = sld [smem:[#allocation0]]
  $region38: #{tpu_custom_call.1} parent=0
    _
  %s7 = ssub.s32 1, %s5
  %s8 = scalar_select 0, %s7, %s5
  $region1: #{tpu_custom_call.1} parent=0
    #allocation2 [shape = 'u8[2048]{0}', space=vmem, size = 0x800, scoped, tag = 'input window, operand 0, single buffered']
    #allocation3 [shape = 's32[1]{0}', space=sflag, size = 0x4, scoped, tag = 'scoped memory for tpu_custom_call.1']
    #allocation4 [shape = 's32[1]{0}', space=sflag, size = 0x4, scoped, tag = 'scoped memory for tpu_custom_call.1']
    #allocation5 [shape = 'u8[8192]{0}', space=vmem, size = 0x2000, scoped, tag = 'input window, operand 1, single buffered']
    #allocation6 [shape = 's32[1]{0}', space=sflag, size = 0x4, scoped, tag = 'scoped memory for tpu_custom_call.1']
    #allocation7 [shape = 'u8[4096]{0}', space=vmem, size = 0x1000, scoped, tag = 'input window, operand 3, single buffered']
    #allocation8 [shape = 'u8[4096]{0}', space=vmem, size = 0x1000, scoped, tag = 'output window, operand 0, single buffered']
    %9 = vsyncpa [#allocation3], 0
    %10 = vsyncpa [#allocation6], 0
    %11 = vsyncpa [#allocation4], 0
    // Predicated region
    $region2: #{tpu_custom_call.1} parent=1 // pred_check
      _
    $region3: #{tpu_custom_call.1} parent=1 // pred_check_branch
      %13 = sbr.rel (0) target = $region5
    $region4: #{tpu_custom_call.1} parent=1 // pred_region
      %15 = vsyncadd [#allocation3], 0
      %s17 = sshll.u32 %s0, 4
      %s18 = int_to_ptr.hbm [resolvable:$true] %s17
      %s19 = sshll.u32 [#allocation2], 4
      %s20 = int_to_ptr.vmem [resolvable:$true] %s19
      %22 = dma.hbm_to_vmem [thread:$0]  %s18, 64, %s20, [#allocation3]
    $region5: #{tpu_custom_call.1} parent=1 // pred_fallthru
      _
    // Predicated region
    $region6: #{tpu_custom_call.1} parent=1 // pred_check
      _
    $region7: #{tpu_custom_call.1} parent=1 // pred_check_branch
      %24 = sbr.rel (0) target = $region9
    $region8: #{tpu_custom_call.1} parent=1 // pred_region
      %26 = vsyncadd [#allocation6], 0
      %s27 = sshll.u32 %s1, 4
      %s28 = int_to_ptr.hbm [resolvable:$true] %s27
      %s29 = sshll.u32 [#allocation5], 4
      %s30 = int_to_ptr.vmem [resolvable:$true] %s29
      %35 = dma.hbm_to_vmem [thread:$0]  %s28, 256, %s30, [#allocation6], 64, 64, 4
    $region9: #{tpu_custom_call.1} parent=1 // pred_fallthru
      _
    // Predicated region
    $region10: #{tpu_custom_call.1} parent=1 // pred_check
      _
    $region11: #{tpu_custom_call.1} parent=1 // pred_check_branch
      %37 = sbr.rel (0) target = $region13
    $region12: #{tpu_custom_call.1} parent=1 // pred_region
      _
    $region13: #{tpu_custom_call.1} parent=1 // pred_fallthru
      _
    // Predicated region
    $region14: #{tpu_custom_call.1} parent=1 // pred_check
      _
    $region15: #{tpu_custom_call.1} parent=1 // pred_check_branch
      %39 = sbr.rel (0) target = $region17
    $region16: #{tpu_custom_call.1} parent=1 // pred_region
      %41 = vsyncadd [#allocation6], 0
      %s43 = sshll.u32 %s3, 4
      %s44 = int_to_ptr.hbm [resolvable:$true] %s43
      %s45 = sshll.u32 [#allocation7], 4
      %s46 = int_to_ptr.vmem [resolvable:$true] %s45
      %48 = dma.hbm_to_vmem [thread:$0]  %s44, 128, %s46, [#allocation6]
    $region17: #{tpu_custom_call.1} parent=1 // pred_fallthru
      _
    // Predicated region
    $region18: #{tpu_custom_call.1} parent=1 // pred_check
      _
    $region19: #{tpu_custom_call.1} parent=1 // pred_check_branch
      %50 = sbr.rel (0) target = $region21
    $region20: #{tpu_custom_call.1} parent=1 // pred_region
      %52 = dma.done [#allocation3], 64
    $region21: #{tpu_custom_call.1} parent=1 // pred_fallthru
      _
    // Predicated region
    $region22: #{tpu_custom_call.1} parent=1 // pred_check
      _
    $region23: #{tpu_custom_call.1} parent=1 // pred_check_branch
      %54 = sbr.rel (0) target = $region25
    $region24: #{tpu_custom_call.1} parent=1 // pred_region
      %56 = dma.done [#allocation6], 256
    $region25: #{tpu_custom_call.1} parent=1 // pred_fallthru
      _
    // Predicated region
    $region26: #{tpu_custom_call.1} parent=1 // pred_check
      _
    $region27: #{tpu_custom_call.1} parent=1 // pred_check_branch
      %58 = sbr.rel (0) target = $region29
    $region28: #{tpu_custom_call.1} parent=1 // pred_region
      %60 = dma.done [#allocation6], 128
    $region29: #{tpu_custom_call.1} parent=1 // pred_fallthru
      _
    %v62 = vld [vmem:[#allocation2] sm:$0xf]
    %v63 = vld [vmem:[#allocation5] sm:$0xf]
    %v64 = vld [vmem:[#allocation5 + $0x4] sm:$0xf]
    %v65 = vld [vmem:[#allocation5 + $0x8] sm:$0xf]
    %v66 = vld [vmem:[#allocation5 + $0xc] sm:$0xf]
    %v71 = vunpack.c.l.b16 %v63
    %v72 = vunpack.c.l.b16 %v64
    %v73 = vunpack.c.l.b16 %v65
    %v74 = vunpack.c.l.b16 %v66
    %v75 = vpack.c.b16 %v72, %v71
    %v76 = vpack.c.b16 %v74, %v73
    %vm79 = vcmask 261120
    %v81 = vsel %vm79, %v62, 0
    %83 = vmatpush.bf16.msra.mxu0 0
    %84 = vmatpush.bf16.msra.mxu0 0
    %85 = vmatpush.bf16.msra.mxu0 0
    %86 = vmatpush.bf16.msra.mxu0 0
    %87 = vmatpush.bf16.msra.mxu0 0
    %88 = vmatpush.bf16.msra.mxu0 0
    %89 = vmatpush.bf16.msra.mxu0 %v76
    %90 = vmatpush.bf16.msra.mxu0 %v75
    %91 = vmatmul.bf16.gmra.mxu0 %v81
    %v92 = vpop.f32.mrf.mxu0
    %v93 = vadd.f32 0.0, %v92
    %v94 = vpop.f32.mrf.mxu0
    %95 = vdwg.mxu0
    %v96 = vld [vmem:[%s2] sm:$0x1]
    %v97 = vmul.f32 %v96, 1.8
    %v98 = vmul.f32 %v93, 1.1
    %v100 = vperm.slane %v97, 0
    %v102 = vadd.f32 %v100, %v98
    %v103 = vld [vmem:[#allocation7] sm:$0xff]
    %v104 = vsub.f32 0.0, %v102
    %v105 = vmul.f32 %v104, 1.442695
    %v106 = vpow.pop %v105
    %v107 = vadd.f32 %v106, 1.0
    %v108 = vrcp.pop %v107
    %v109 = vmul.f32 %v102, %v108
    %v110 = vmul.f32 %v109, %v103
    %111 = vst [vmem:[#allocation8] sm:$0xff] %v110
    // Predicated region
    $region30: #{tpu_custom_call.1} parent=1 // pred_check
      _
    $region31: #{tpu_custom_call.1} parent=1 // pred_check_branch
      %113 = sbr.rel (0) target = $region33
    $region32: #{tpu_custom_call.1} parent=1 // pred_region
      %115 = vsyncadd [#allocation4], 0
      %s117 = sshll.u32 [#allocation8], 4
      %s118 = int_to_ptr.vmem [resolvable:$true] %s117
      %s119 = sshll.u32 %s4, 4
      %s120 = int_to_ptr.hbm [resolvable:$true] %s119
      %122 = dma.vmem_to_hbm [thread:$0]  %s118, 128, %s120, [#allocation4]
    $region33: #{tpu_custom_call.1} parent=1 // pred_fallthru
      _
    // Predicated region
    $region34: #{tpu_custom_call.1} parent=1 // pred_check
      _
    $region35: #{tpu_custom_call.1} parent=1 // pred_check_branch
      %124 = sbr.rel (0) target = $region37
    $region36: #{tpu_custom_call.1} parent=1 // pred_region
      %126 = dma.done [#allocation4], 128
    $region37: #{tpu_custom_call.1} parent=1 // pred_fallthru
      _
    %127 = vsyncpa [#allocation3], 1
    %128 = vsyncpa [#allocation6], 1
    %129 = vsyncpa [#allocation4], 1

</llo_original>
